<compile_context>
chip_gen: v6e
topology: v6e:2x2x1
jax: 0.10.0
libtpu: 0.0.40
codegen_flags: <defaults>
</compile_context>

<pallas_src>
import jax
import jax.numpy as jnp
from jax.experimental import pallas as pl
from jax.experimental.pallas import tpu as pltpu

LOG_STEP = 7       # input / output feature dim (from the PyTorch script)
N_HIDDEN = 32      # n_hidden_neurons
N_LAYERS = 8       # fc1 .. fc8
F_PAD = 32         # padded feature dim (7 -> 32) so all layers share one packed shape
LANE = 128         # TPU lane width


def _round_up(n, m):
    return ((n + m - 1) // m) * m


def _make_kernel(n_layers, compute_dtype):
    def satnet_kernel(x_ref, w_ref, b_ref, o_ref):
        # x_ref : (F_PAD, TB)                 feature-major activation tile (f32)
        # w_ref : (n_layers, F_PAD, F_PAD)    resident packed weights, (out, in) layout,
        #                                     already stored in compute_dtype
        # b_ref : (n_layers, F_PAD, 1)        resident packed biases (f32)
        # o_ref : (F_PAD, TB)
        h = x_ref[...]                                   # f32 (F_PAD, TB)
        for layer in range(n_layers):                    # static unroll: 8 layers
            w = w_ref[layer]                             # (F_PAD, F_PAD), compute_dtype
            b = b_ref[layer]                             # (F_PAD, 1), f32
            h = jnp.dot(w, h.astype(compute_dtype),
                        preferred_element_type=jnp.float32) + b   # f32 acc + f32 bias
            if layer < n_layers - 1:
                h = jnp.maximum(h, 0.0)                  # ReLU in f32 (v5e-safe)
        o_ref[...] = h
    return satnet_kernel


def pack_params(params, f_pad=F_PAD, weight_dtype=jnp.float32):
    """Pack per-layer (W_in_out, b) into zero-padded (L, f_pad, f_pad) + (L, f_pad, 1).

    Weights are stored transposed (out, in) so the kernel computes W @ h^T + b, which
    is exactly nn.Linear applied to feature-major activations.  Weights are cast to
    `weight_dtype` once here (trace time) so the kernel does no per-layer weight casts.
    """
    n = len(params)
    w_pack = jnp.zeros((n, f_pad, f_pad), jnp.float32)
    b_pack = jnp.zeros((n, f_pad, 1), jnp.float32)
    for i, (w, b) in enumerate(params):
        d_in, d_out = w.shape
        w_pack = w_pack.at[i, :d_out, :d_in].set(w.T)
        b_pack = b_pack.at[i, :d_out, 0].set(b.reshape(-1))
    return w_pack.astype(weight_dtype), b_pack


def satnet_forward(x, params, *, block_rows=512, compute_dtype=jnp.float32):
    """x: (B, LOG_STEP) float32.  params: list of (W_in_out, b) pairs."""
    B, d_in = x.shape
    d_out = params[-1][0].shape[1]
    n_layers = len(params)

    w_pack, b_pack = pack_params(params, weight_dtype=compute_dtype)

    # Batch tile: multiple of 128 lanes, capped by block_rows.
    tb = min(_round_up(block_rows, LANE), _round_up(max(B, 1), LANE))
    b_pad = _round_up(B, tb)

    # Feature-major, zero-padded input: (F_PAD, b_pad).  Padded rows/cols are zero so
    # they cannot inject NaN/Inf through the zero-padded weight columns.
    xt = jnp.zeros((F_PAD, b_pad), jnp.float32).at[:d_in, :B].set(x.T)

    grid = (b_pad // tb,)
    out_t = pl.pallas_call(
        _make_kernel(n_layers, compute_dtype),
        out_shape=jax.ShapeDtypeStruct((F_PAD, b_pad), jnp.float32),
        grid=grid,
        in_specs=[
            pl.BlockSpec((F_PAD, tb), lambda i: (0, i)),                  # x tile (pipelined)
            pl.BlockSpec((n_layers, F_PAD, F_PAD), lambda i: (0, 0, 0)),  # weights resident
            pl.BlockSpec((n_layers, F_PAD, 1), lambda i: (0, 0, 0)),      # biases resident
        ],
        out_specs=pl.BlockSpec((F_PAD, tb), lambda i: (0, i)),
        compiler_params=pltpu.CompilerParams(
            dimension_semantics=("parallel",),   # shard batch tiles across TCs on v7x
        ),
    )(xt, w_pack, b_pack)

    # Slice off feature padding and batch padding, back to (B, d_out) row-major.
    return out_t[:d_out, :B].T


def init_params(key, in_dim=LOG_STEP, hidden=N_HIDDEN, out_dim=LOG_STEP):
    """Deterministic synthetic init. Weights stored as (in, out); bias as (1, out)."""
    dims = [in_dim] + [hidden] * (N_LAYERS - 1) + [out_dim]
    params = []
    for i in range(N_LAYERS):
        d_in, d_out = dims[i], dims[i + 1]
        key, kw, kb = jax.random.split(key, 3)
        bound = 1.0 / jnp.sqrt(jnp.float32(d_in))  # mimic nn.Linear default U(-1/sqrt(in), 1/sqrt(in))
        w = jax.random.uniform(kw, (d_in, d_out), jnp.float32, -bound, bound)
        b = jax.random.uniform(kb, (1, d_out), jnp.float32, -bound, bound)
        params.append((w, b))
    return params


def satnet_reference(x, params):
    """Plain-JAX reference of the same forward pass (f32)."""
    h = x
    for i, (w, b) in enumerate(params):
        h = h @ w + b
        if i < len(params) - 1:
            h = jnp.maximum(h, 0.0)
    return h


if __name__ == "__main__":
    key = jax.random.PRNGKey(0)
    kx, kp = jax.random.split(key)

    batch = 8
    x = jax.random.normal(kx, (batch, LOG_STEP), jnp.float32)
    params = init_params(kp)

    ref = satnet_reference(x, params)

    # f32 path: exact nn.Linear numerics, tight tolerance.
    out_f32 = jax.block_until_ready(satnet_forward(x, params, compute_dtype=jnp.float32))
    assert out_f32.shape == (batch, LOG_STEP)
    assert jnp.allclose(out_f32, ref, atol=1e-5, rtol=1e-5)

    # bf16-MXU path: bf16 operands (weights pre-cast, activations cast in-kernel),
    # f32 accumulation -> looser tolerance.
    out_bf16 = jax.block_until_ready(satnet_forward(x, params, compute_dtype=jnp.bfloat16))
    assert out_bf16.shape == (batch, LOG_STEP)
    assert jnp.allclose(out_bf16, ref, atol=5e-2, rtol=5e-2)

    print("KERNEL_OK")
</pallas_src>

<mosaic_0001>
module attributes {stable_mosaic.version = 11 : i64} {
  func.func @satnet_kernel(%arg0: i32, %arg1: memref<32x128xf32, #tpu.memory_space<vmem>>, %arg2: memref<8x32x32xf32, #tpu.memory_space<vmem>>, %arg3: memref<8x32x1xf32, #tpu.memory_space<vmem>>, %arg4: memref<32x128xf32, #tpu.memory_space<vmem>>) attributes {dimension_semantics = [#tpu.dimension_semantics<parallel>], iteration_bounds = array<i64: 1>, scalar_prefetch = 0 : i64, scratch_operands = 0 : i64, tpu.core_type = #tpu.core_type<tc>, window_params = [{transform_indices = @transform_0, window_bounds = array<i64: 32, 128>}, {pipeline_mode = #tpu.pipeline_mode<synchronous>, transform_indices = @transform_1, window_bounds = array<i64: 8, 32, 32>}, {pipeline_mode = #tpu.pipeline_mode<synchronous>, transform_indices = @transform_2, window_bounds = array<i64: 8, 32, 1>}, {transform_indices = @transform_3, window_bounds = array<i64: 32, 128>}]} {
    %c0 = arith.constant 0 : index
    %c0_0 = arith.constant 0 : index
    %0 = vector.load %arg1[%c0, %c0_0] : memref<32x128xf32, #tpu.memory_space<vmem>>, vector<32x128xf32>
    %c0_1 = arith.constant 0 : index
    %c0_2 = arith.constant 0 : index
    %c0_3 = arith.constant 0 : index
    %1 = vector.load %arg2[%c0_1, %c0_2, %c0_3] : memref<8x32x32xf32, #tpu.memory_space<vmem>>, vector<1x32x32xf32>
    %2 = vector.shape_cast %1 : vector<1x32x32xf32> to vector<32x32xf32>
    %c0_4 = arith.constant 0 : index
    %c0_5 = arith.constant 0 : index
    %c0_6 = arith.constant 0 : index
    %3 = vector.load %arg3[%c0_4, %c0_5, %c0_6] : memref<8x32x1xf32, #tpu.memory_space<vmem>>, vector<1x32x1xf32>
    %4 = vector.shape_cast %3 : vector<1x32x1xf32> to vector<32x1xf32>
    %cst = arith.constant dense<0.000000e+00> : vector<32x128xf32>
    %5 = tpu.matmul %2, %0, %cst {dimension_numbers = #tpu.dot_dimension_numbers<[1], [0], [0], [1], [0, 0, 1, 1], [], []>} : vector<32x32xf32>, vector<32x128xf32>, vector<32x128xf32> -> vector<32x128xf32>
    %6 = vector.broadcast %4 : vector<32x1xf32> to vector<32x128xf32>
    %7 = arith.addf %5, %6 : vector<32x128xf32>
    %cst_7 = arith.constant 0.000000e+00 : f32
    %8 = vector.broadcast %cst_7 : f32 to vector<32x128xf32>
    %9 = arith.maximumf %7, %8 : vector<32x128xf32>
    %c1 = arith.constant 1 : index
    %c0_8 = arith.constant 0 : index
    %c0_9 = arith.constant 0 : index
    %10 = vector.load %arg2[%c1, %c0_8, %c0_9] : memref<8x32x32xf32, #tpu.memory_space<vmem>>, vector<1x32x32xf32>
    %11 = vector.shape_cast %10 : vector<1x32x32xf32> to vector<32x32xf32>
    %c1_10 = arith.constant 1 : index
    %c0_11 = arith.constant 0 : index
    %c0_12 = arith.constant 0 : index
    %12 = vector.load %arg3[%c1_10, %c0_11, %c0_12] : memref<8x32x1xf32, #tpu.memory_space<vmem>>, vector<1x32x1xf32>
    %13 = vector.shape_cast %12 : vector<1x32x1xf32> to vector<32x1xf32>
    %cst_13 = arith.constant dense<0.000000e+00> : vector<32x128xf32>
    %14 = tpu.matmul %11, %9, %cst_13 {dimension_numbers = #tpu.dot_dimension_numbers<[1], [0], [0], [1], [0, 0, 1, 1], [], []>} : vector<32x32xf32>, vector<32x128xf32>, vector<32x128xf32> -> vector<32x128xf32>
    %15 = vector.broadcast %13 : vector<32x1xf32> to vector<32x128xf32>
    %16 = arith.addf %14, %15 : vector<32x128xf32>
    %cst_14 = arith.constant 0.000000e+00 : f32
    %17 = vector.broadcast %cst_14 : f32 to vector<32x128xf32>
    %18 = arith.maximumf %16, %17 : vector<32x128xf32>
    %c2 = arith.constant 2 : index
    %c0_15 = arith.constant 0 : index
    %c0_16 = arith.constant 0 : index
    %19 = vector.load %arg2[%c2, %c0_15, %c0_16] : memref<8x32x32xf32, #tpu.memory_space<vmem>>, vector<1x32x32xf32>
    %20 = vector.shape_cast %19 : vector<1x32x32xf32> to vector<32x32xf32>
    %c2_17 = arith.constant 2 : index
    %c0_18 = arith.constant 0 : index
    %c0_19 = arith.constant 0 : index
    %21 = vector.load %arg3[%c2_17, %c0_18, %c0_19] : memref<8x32x1xf32, #tpu.memory_space<vmem>>, vector<1x32x1xf32>
    %22 = vector.shape_cast %21 : vector<1x32x1xf32> to vector<32x1xf32>
    %cst_20 = arith.constant dense<0.000000e+00> : vector<32x128xf32>
    %23 = tpu.matmul %20, %18, %cst_20 {dimension_numbers = #tpu.dot_dimension_numbers<[1], [0], [0], [1], [0, 0, 1, 1], [], []>} : vector<32x32xf32>, vector<32x128xf32>, vector<32x128xf32> -> vector<32x128xf32>
    %24 = vector.broadcast %22 : vector<32x1xf32> to vector<32x128xf32>
    %25 = arith.addf %23, %24 : vector<32x128xf32>
    %cst_21 = arith.constant 0.000000e+00 : f32
    %26 = vector.broadcast %cst_21 : f32 to vector<32x128xf32>
    %27 = arith.maximumf %25, %26 : vector<32x128xf32>
    %c3 = arith.constant 3 : index
    %c0_22 = arith.constant 0 : index
    %c0_23 = arith.constant 0 : index
    %28 = vector.load %arg2[%c3, %c0_22, %c0_23] : memref<8x32x32xf32, #tpu.memory_space<vmem>>, vector<1x32x32xf32>
    %29 = vector.shape_cast %28 : vector<1x32x32xf32> to vector<32x32xf32>
    %c3_24 = arith.constant 3 : index
    %c0_25 = arith.constant 0 : index
    %c0_26 = arith.constant 0 : index
    %30 = vector.load %arg3[%c3_24, %c0_25, %c0_26] : memref<8x32x1xf32, #tpu.memory_space<vmem>>, vector<1x32x1xf32>
    %31 = vector.shape_cast %30 : vector<1x32x1xf32> to vector<32x1xf32>
    %cst_27 = arith.constant dense<0.000000e+00> : vector<32x128xf32>
    %32 = tpu.matmul %29, %27, %cst_27 {dimension_numbers = #tpu.dot_dimension_numbers<[1], [0], [0], [1], [0, 0, 1, 1], [], []>} : vector<32x32xf32>, vector<32x128xf32>, vector<32x128xf32> -> vector<32x128xf32>
    %33 = vector.broadcast %31 : vector<32x1xf32> to vector<32x128xf32>
    %34 = arith.addf %32, %33 : vector<32x128xf32>
    %cst_28 = arith.constant 0.000000e+00 : f32
    %35 = vector.broadcast %cst_28 : f32 to vector<32x128xf32>
    %36 = arith.maximumf %34, %35 : vector<32x128xf32>
    %c4 = arith.constant 4 : index
    %c0_29 = arith.constant 0 : index
    %c0_30 = arith.constant 0 : index
    %37 = vector.load %arg2[%c4, %c0_29, %c0_30] : memref<8x32x32xf32, #tpu.memory_space<vmem>>, vector<1x32x32xf32>
    %38 = vector.shape_cast %37 : vector<1x32x32xf32> to vector<32x32xf32>
    %c4_31 = arith.constant 4 : index
    %c0_32 = arith.constant 0 : index
    %c0_33 = arith.constant 0 : index
    %39 = vector.load %arg3[%c4_31, %c0_32, %c0_33] : memref<8x32x1xf32, #tpu.memory_space<vmem>>, vector<1x32x1xf32>
    %40 = vector.shape_cast %39 : vector<1x32x1xf32> to vector<32x1xf32>
    %cst_34 = arith.constant dense<0.000000e+00> : vector<32x128xf32>
    %41 = tpu.matmul %38, %36, %cst_34 {dimension_numbers = #tpu.dot_dimension_numbers<[1], [0], [0], [1], [0, 0, 1, 1], [], []>} : vector<32x32xf32>, vector<32x128xf32>, vector<32x128xf32> -> vector<32x128xf32>
    %42 = vector.broadcast %40 : vector<32x1xf32> to vector<32x128xf32>
    %43 = arith.addf %41, %42 : vector<32x128xf32>
    %cst_35 = arith.constant 0.000000e+00 : f32
    %44 = vector.broadcast %cst_35 : f32 to vector<32x128xf32>
    %45 = arith.maximumf %43, %44 : vector<32x128xf32>
    %c5 = arith.constant 5 : index
    %c0_36 = arith.constant 0 : index
    %c0_37 = arith.constant 0 : index
    %46 = vector.load %arg2[%c5, %c0_36, %c0_37] : memref<8x32x32xf32, #tpu.memory_space<vmem>>, vector<1x32x32xf32>
    %47 = vector.shape_cast %46 : vector<1x32x32xf32> to vector<32x32xf32>
    %c5_38 = arith.constant 5 : index
    %c0_39 = arith.constant 0 : index
    %c0_40 = arith.constant 0 : index
    %48 = vector.load %arg3[%c5_38, %c0_39, %c0_40] : memref<8x32x1xf32, #tpu.memory_space<vmem>>, vector<1x32x1xf32>
    %49 = vector.shape_cast %48 : vector<1x32x1xf32> to vector<32x1xf32>
    %cst_41 = arith.constant dense<0.000000e+00> : vector<32x128xf32>
    %50 = tpu.matmul %47, %45, %cst_41 {dimension_numbers = #tpu.dot_dimension_numbers<[1], [0], [0], [1], [0, 0, 1, 1], [], []>} : vector<32x32xf32>, vector<32x128xf32>, vector<32x128xf32> -> vector<32x128xf32>
    %51 = vector.broadcast %49 : vector<32x1xf32> to vector<32x128xf32>
    %52 = arith.addf %50, %51 : vector<32x128xf32>
    %cst_42 = arith.constant 0.000000e+00 : f32
    %53 = vector.broadcast %cst_42 : f32 to vector<32x128xf32>
    %54 = arith.maximumf %52, %53 : vector<32x128xf32>
    %c6 = arith.constant 6 : index
    %c0_43 = arith.constant 0 : index
    %c0_44 = arith.constant 0 : index
    %55 = vector.load %arg2[%c6, %c0_43, %c0_44] : memref<8x32x32xf32, #tpu.memory_space<vmem>>, vector<1x32x32xf32>
    %56 = vector.shape_cast %55 : vector<1x32x32xf32> to vector<32x32xf32>
    %c6_45 = arith.constant 6 : index
    %c0_46 = arith.constant 0 : index
    %c0_47 = arith.constant 0 : index
    %57 = vector.load %arg3[%c6_45, %c0_46, %c0_47] : memref<8x32x1xf32, #tpu.memory_space<vmem>>, vector<1x32x1xf32>
    %58 = vector.shape_cast %57 : vector<1x32x1xf32> to vector<32x1xf32>
    %cst_48 = arith.constant dense<0.000000e+00> : vector<32x128xf32>
    %59 = tpu.matmul %56, %54, %cst_48 {dimension_numbers = #tpu.dot_dimension_numbers<[1], [0], [0], [1], [0, 0, 1, 1], [], []>} : vector<32x32xf32>, vector<32x128xf32>, vector<32x128xf32> -> vector<32x128xf32>
    %60 = vector.broadcast %58 : vector<32x1xf32> to vector<32x128xf32>
    %61 = arith.addf %59, %60 : vector<32x128xf32>
    %cst_49 = arith.constant 0.000000e+00 : f32
    %62 = vector.broadcast %cst_49 : f32 to vector<32x128xf32>
    %63 = arith.maximumf %61, %62 : vector<32x128xf32>
    %c7 = arith.constant 7 : index
    %c0_50 = arith.constant 0 : index
    %c0_51 = arith.constant 0 : index
    %64 = vector.load %arg2[%c7, %c0_50, %c0_51] : memref<8x32x32xf32, #tpu.memory_space<vmem>>, vector<1x32x32xf32>
    %65 = vector.shape_cast %64 : vector<1x32x32xf32> to vector<32x32xf32>
    %c7_52 = arith.constant 7 : index
    %c0_53 = arith.constant 0 : index
    %c0_54 = arith.constant 0 : index
    %66 = vector.load %arg3[%c7_52, %c0_53, %c0_54] : memref<8x32x1xf32, #tpu.memory_space<vmem>>, vector<1x32x1xf32>
    %67 = vector.shape_cast %66 : vector<1x32x1xf32> to vector<32x1xf32>
    %cst_55 = arith.constant dense<0.000000e+00> : vector<32x128xf32>
    %68 = tpu.matmul %65, %63, %cst_55 {dimension_numbers = #tpu.dot_dimension_numbers<[1], [0], [0], [1], [0, 0, 1, 1], [], []>} : vector<32x32xf32>, vector<32x128xf32>, vector<32x128xf32> -> vector<32x128xf32>
    %69 = vector.broadcast %67 : vector<32x1xf32> to vector<32x128xf32>
    %70 = arith.addf %68, %69 : vector<32x128xf32>
    %c0_56 = arith.constant 0 : index
    %c0_57 = arith.constant 0 : index
    %71 = vector.load %arg4[%c0_56, %c0_57] : memref<32x128xf32, #tpu.memory_space<vmem>>, vector<32x128xf32>
    tpu.vector_store %arg4[%c0_56, %c0_57], %70 {strides = array<i32>} : memref<32x128xf32, #tpu.memory_space<vmem>>, vector<32x128xf32>,
    return
  }
  func.func @transform_0(%arg0: i32) -> (i32, i32) {
    %c0_i32 = arith.constant 0 : i32
    %c0_i32_0 = arith.constant 0 : i32
    return %c0_i32, %arg0 : i32, i32
  }
  func.func @transform_1(%arg0: i32) -> (i32, i32, i32) {
    %c0_i32 = arith.constant 0 : i32
    %c0_i32_0 = arith.constant 0 : i32
    %c0_i32_1 = arith.constant 0 : i32
    %c0_i32_2 = arith.constant 0 : i32
    return %c0_i32, %c0_i32_0, %c0_i32_1 : i32, i32, i32
  }
  func.func @transform_2(%arg0: i32) -> (i32, i32, i32) {
    %c0_i32 = arith.constant 0 : i32
    %c0_i32_0 = arith.constant 0 : i32
    %c0_i32_1 = arith.constant 0 : i32
    %c0_i32_2 = arith.constant 0 : i32
    return %c0_i32, %c0_i32_0, %c0_i32_1 : i32, i32, i32
  }
  func.func @transform_3(%arg0: i32) -> (i32, i32) {
    %c0_i32 = arith.constant 0 : i32
    %c0_i32_0 = arith.constant 0 : i32
    return %c0_i32, %arg0 : i32, i32
  }
}

</mosaic_0001>

<llo_original>
// kernel: tpu_custom_call.1
$region0: #{tpu_custom_call.1}
  #allocation0 [shape = 'u32[]', space=smem, size = 0x4, offset = 0x4, fixed_abs, tag = 'smem constant byte address 0x4 - core index']
  #allocation1 [shape = 'u32[144,128]{1,0:T(1,128)}', space=vmem, size = 0x12000, scoped, tag = 'internal scratch']
  %s0 = inlined_call_operand.hbm [shape: f32[32,128], index: 0, kind: input, shape index: {}]
  %s1 = inlined_call_operand.vmem [shape: f32[8,32,32], index: 1, kind: input, shape index: {}]
  %s2 = inlined_call_operand.vmem [shape: f32[8,32,1], index: 2, kind: input, shape index: {}]
  %s3 = inlined_call_operand.hbm [shape: f32[32,128], index: 3, kind: output, shape index: {}]
  %s4 = sld [smem:[#allocation0]]
  $region26: #{tpu_custom_call.1} parent=0
    _
  %s6 = ssub.s32 1, %s4
  %s7 = scalar_select 0, %s6, %s4
  $region1: #{tpu_custom_call.1} parent=0
    #allocation2 [shape = 'u8[16384]{0}', space=vmem, size = 0x4000, scoped, tag = 'input window, operand 0, single buffered']
    #allocation3 [shape = 's32[1]{0}', space=sflag, size = 0x4, scoped, tag = 'scoped memory for tpu_custom_call.1']
    #allocation4 [shape = 's32[1]{0}', space=sflag, size = 0x4, scoped, tag = 'scoped memory for tpu_custom_call.1']
    #allocation5 [shape = 'u8[16384]{0}', space=vmem, size = 0x4000, scoped, tag = 'output window, operand 0, single buffered']
    %8 = vsyncpa [#allocation3], 0
    %9 = vsyncpa [#allocation4], 0
    // Predicated region
    $region2: #{tpu_custom_call.1} parent=1 // pred_check
      _
    $region3: #{tpu_custom_call.1} parent=1 // pred_check_branch
      %11 = sbr.rel (0) target = $region5
    $region4: #{tpu_custom_call.1} parent=1 // pred_region
      %s13 = ssub.s32 512, 512
      %14 = vsyncadd [#allocation3], %s13
      %s15 = sshll.u32 [#allocation2], 4
      %s16 = int_to_ptr.vmem [resolvable:$true] %s15
      %21 = dma.hbm_to_vmem [thread:$0]  %s0, 512, %s16, [#allocation3], 128, 128, 8
    $region5: #{tpu_custom_call.1} parent=1 // pred_fallthru
      _
    // Predicated region
    $region6: #{tpu_custom_call.1} parent=1 // pred_check
      _
    $region7: #{tpu_custom_call.1} parent=1 // pred_check_branch
      %23 = sbr.rel (0) target = $region9
    $region8: #{tpu_custom_call.1} parent=1 // pred_region
      _
    $region9: #{tpu_custom_call.1} parent=1 // pred_fallthru
      _
    // Predicated region
    $region10: #{tpu_custom_call.1} parent=1 // pred_check
      _
    $region11: #{tpu_custom_call.1} parent=1 // pred_check_branch
      %25 = sbr.rel (0) target = $region13
    $region12: #{tpu_custom_call.1} parent=1 // pred_region
      _
    $region13: #{tpu_custom_call.1} parent=1 // pred_fallthru
      _
    // Predicated region
    $region14: #{tpu_custom_call.1} parent=1 // pred_check
      _
    $region15: #{tpu_custom_call.1} parent=1 // pred_check_branch
      %27 = sbr.rel (0) target = $region17
    $region16: #{tpu_custom_call.1} parent=1 // pred_region
      %28 = dma.done [#allocation3], 512
    $region17: #{tpu_custom_call.1} parent=1 // pred_fallthru
      _
    %v29 = vld [vmem:[#allocation2] sm:$0xff]
    %v30 = vld [vmem:[#allocation2 + $0x8] sm:$0xff]
    %v31 = vld [vmem:[#allocation2 + $0x10] sm:$0xff]
    %v32 = vld [vmem:[#allocation2 + $0x18] sm:$0xff]
    %v33 = vld [vmem:[%s1] sm:$0xff]
    %v34 = vld [vmem:[%s1 + $0x8] sm:$0xff]
    %v35 = vld [vmem:[%s1 + $0x10] sm:$0xff]
    %v36 = vld [vmem:[%s1 + $0x18] sm:$0xff]
    %v37 = vld [vmem:[%s2] sm:$0xff]
    %v38 = vld [vmem:[%s2 + $0x8] sm:$0xff]
    %v39 = vld [vmem:[%s2 + $0x10] sm:$0xff]
    %v40 = vld [vmem:[%s2 + $0x18] sm:$0xff]
    %42 = vset.pattern.permute.xlu0 0
    %43 = vperm.xlu0 %42, %v37
    %v44 = vpop.permute.xlu0 %43
    %47 = vset.pattern.permute.xlu0 0
    %48 = vperm.xlu0 %47, %v38
    %v49 = vpop.permute.xlu0 %48
    %52 = vset.pattern.permute.xlu0 0
    %53 = vperm.xlu0 %52, %v39
    %v54 = vpop.permute.xlu0 %53
    %57 = vset.pattern.permute.xlu0 0
    %58 = vperm.xlu0 %57, %v40
    %v59 = vpop.permute.xlu0 %58
    %vm61 = vcmask 261120
    %v63 = vsel %vm61, %v33, 0
    %v66 = vsel %vm61, %v34, 0
    %v69 = vsel %vm61, %v35, 0
    %v72 = vsel %vm61, %v36, 0
    %74 = vmatprep.subr.mxu0 0.0
    %75 = vmatpush1.msra.mxu0 0.0
    %76 = vmatprep.subr.mxu0 0.0
    %77 = vmatpush1.msra.mxu0 0.0
    %78 = vmatprep.subr.mxu0 0.0
    %79 = vmatpush1.msra.mxu0 0.0
    %80 = vmatprep.subr.mxu0 0.0
    %81 = vmatpush1.msra.mxu0 0.0
    %82 = vmatprep.subr.mxu0 0.0
    %83 = vmatpush1.msra.mxu0 0.0
    %84 = vmatprep.subr.mxu0 0.0
    %85 = vmatpush1.msra.mxu0 0.0
    %86 = vmatprep.subr.mxu0 0.0
    %87 = vmatpush1.msra.mxu0 0.0
    %88 = vmatprep.subr.mxu0 0.0
    %89 = vmatpush1.msra.mxu0 0.0
    %90 = vmatprep.subr.mxu0 0.0
    %91 = vmatpush1.msra.mxu0 0.0
    %92 = vmatprep.subr.mxu0 0.0
    %93 = vmatpush1.msra.mxu0 0.0
    %94 = vmatprep.subr.mxu0 0.0
    %95 = vmatpush1.msra.mxu0 0.0
    %96 = vmatprep.subr.mxu0 0.0
    %97 = vmatpush1.msra.mxu0 0.0
    %98 = vmatprep.subr.mxu0 0.0
    %99 = vmatpush1.msra.mxu0 %v32
    %100 = vmatprep.subr.mxu0 0.0
    %101 = vmatpush1.msra.mxu0 %v31
    %102 = vmatprep.subr.mxu0 0.0
    %103 = vmatpush1.msra.mxu0 %v30
    %104 = vmatprep.subr.mxu0 0.0
    %105 = vmatpush1.msra.mxu0 %v29
    %106 = vmatprep.subr.mxu0 0.0
    %107 = vmatpush2.msra.mxu0 0.0
    %108 = vmatprep.subr.mxu0 0.0
    %109 = vmatpush2.msra.mxu0 0.0
    %110 = vmatprep.subr.mxu0 0.0
    %111 = vmatpush2.msra.mxu0 0.0
    %112 = vmatprep.subr.mxu0 0.0
    %113 = vmatpush2.msra.mxu0 0.0
    %114 = vmatprep.subr.mxu0 0.0
    %115 = vmatpush2.msra.mxu0 0.0
    %116 = vmatprep.subr.mxu0 0.0
    %117 = vmatpush2.msra.mxu0 0.0
    %118 = vmatprep.subr.mxu0 0.0
    %119 = vmatpush2.msra.mxu0 0.0
    %120 = vmatprep.subr.mxu0 0.0
    %121 = vmatpush2.msra.mxu0 0.0
    %122 = vmatprep.subr.mxu0 0.0
    %123 = vmatpush2.msra.mxu0 0.0
    %124 = vmatprep.subr.mxu0 0.0
    %125 = vmatpush2.msra.mxu0 0.0
    %126 = vmatprep.subr.mxu0 0.0
    %127 = vmatpush2.msra.mxu0 0.0
    %128 = vmatprep.subr.mxu0 0.0
    %129 = vmatpush2.msra.mxu0 0.0
    %130 = vmatprep.subr.mxu0 0.0
    %131 = vmatpush2.msra.mxu0 0.0
    %132 = vmatprep.subr.mxu0 0.0
    %133 = vmatpush2.msra.mxu0 0.0
    %134 = vmatprep.subr.mxu0 0.0
    %135 = vmatpush2.msra.mxu0 0.0
    %136 = vmatprep.subr.mxu0 0.0
    %137 = vmatpush2.msra.mxu0 0.0
    %138 = vmatprep.mubr.f32.mxu0 0.0
    %139 = vmatmul.mubr.f32.gmra.mxu0 %v63
    %v140 = vpop.f32.mrf.mxu0
    %v141 = vadd.f32 %v44, %v140
    %v142 = vpop.f32.mrf.mxu0
    %143 = vmatprep.mubr.f32.mxu0 0.0
    %144 = vmatmul.mubr.f32.gmra.mxu0 %v66
    %v145 = vpop.f32.mrf.mxu0
    %v146 = vadd.f32 %v49, %v145
    %v147 = vpop.f32.mrf.mxu0
    %148 = vmatprep.mubr.f32.mxu0 0.0
    %149 = vmatmul.mubr.f32.gmra.mxu0 %v69
    %v150 = vpop.f32.mrf.mxu0
    %v151 = vadd.f32 %v54, %v150
    %v152 = vpop.f32.mrf.mxu0
    %153 = vmatprep.mubr.f32.mxu0 0.0
    %154 = vmatmul.mubr.f32.gmra.mxu0 %v72
    %v155 = vpop.f32.mrf.mxu0
    %v156 = vadd.f32 %v59, %v155
    %v157 = vpop.f32.mrf.mxu0
    %158 = vdwg.mxu0
    %v159 = vmax.f32 %v141, 0.0
    %v160 = vmax.f32 %v146, 0.0
    %v161 = vmax.f32 %v151, 0.0
    %v162 = vmax.f32 %v156, 0.0
    %s163 = scalar_lea.vmem %s1, 32
    %v164 = vld [vmem:[%s163] sm:$0xff]
    %v165 = vld [vmem:[%s163 + $0x8] sm:$0xff]
    %v166 = vld [vmem:[%s163 + $0x10] sm:$0xff]
    %v167 = vld [vmem:[%s163 + $0x18] sm:$0xff]
    %s168 = scalar_lea.vmem %s2, 32
    %v169 = vld [vmem:[%s168] sm:$0xff]
    %v170 = vld [vmem:[%s168 + $0x8] sm:$0xff]
    %v171 = vld [vmem:[%s168 + $0x10] sm:$0xff]
    %v172 = vld [vmem:[%s168 + $0x18] sm:$0xff]
    %174 = vset.pattern.permute.xlu0 0
    %175 = vperm.xlu0 %174, %v169
    %v176 = vpop.permute.xlu0 %175
    %179 = vset.pattern.permute.xlu0 0
    %180 = vperm.xlu0 %179, %v170
    %v181 = vpop.permute.xlu0 %180
    %184 = vset.pattern.permute.xlu0 0
    %185 = vperm.xlu0 %184, %v171
    %v186 = vpop.permute.xlu0 %185
    %189 = vset.pattern.permute.xlu0 0
    %190 = vperm.xlu0 %189, %v172
    %v191 = vpop.permute.xlu0 %190
    %v194 = vsel %vm61, %v164, 0
    %v197 = vsel %vm61, %v165, 0
    %v200 = vsel %vm61, %v166, 0
    %v203 = vsel %vm61, %v167, 0
    %205 = vmatprep.subr.mxu0 0.0
    %206 = vmatpush1.msra.mxu0 0.0
    %207 = vmatprep.subr.mxu0 0.0
    %208 = vmatpush1.msra.mxu0 0.0
    %209 = vmatprep.subr.mxu0 0.0
    %210 = vmatpush1.msra.mxu0 0.0
    %211 = vmatprep.subr.mxu0 0.0
    %212 = vmatpush1.msra.mxu0 0.0
    %213 = vmatprep.subr.mxu0 0.0
    %214 = vmatpush1.msra.mxu0 0.0
    %215 = vmatprep.subr.mxu0 0.0
    %216 = vmatpush1.msra.mxu0 0.0
    %217 = vmatprep.subr.mxu0 0.0
    %218 = vmatpush1.msra.mxu0 0.0
    %219 = vmatprep.subr.mxu0 0.0
    %220 = vmatpush1.msra.mxu0 0.0
    %221 = vmatprep.subr.mxu0 0.0
    %222 = vmatpush1.msra.mxu0 0.0
    %223 = vmatprep.subr.mxu0 0.0
    %224 = vmatpush1.msra.mxu0 0.0
    %225 = vmatprep.subr.mxu0 0.0
    %226 = vmatpush1.msra.mxu0 0.0
    %227 = vmatprep.subr.mxu0 0.0
    %228 = vmatpush1.msra.mxu0 0.0
    %229 = vmatprep.subr.mxu0 0.0
    %230 = vmatpush1.msra.mxu0 %v162
    %231 = vmatprep.subr.mxu0 0.0
    %232 = vmatpush1.msra.mxu0 %v161
    %233 = vmatprep.subr.mxu0 0.0
    %234 = vmatpush1.msra.mxu0 %v160
    %235 = vmatprep.subr.mxu0 0.0
    %236 = vmatpush1.msra.mxu0 %v159
    %237 = vmatprep.subr.mxu0 0.0
    %238 = vmatpush2.msra.mxu0 0.0
    %239 = vmatprep.subr.mxu0 0.0
    %240 = vmatpush2.msra.mxu0 0.0
    %241 = vmatprep.subr.mxu0 0.0
    %242 = vmatpush2.msra.mxu0 0.0
    %243 = vmatprep.subr.mxu0 0.0
    %244 = vmatpush2.msra.mxu0 0.0
    %245 = vmatprep.subr.mxu0 0.0
    %246 = vmatpush2.msra.mxu0 0.0
    %247 = vmatprep.subr.mxu0 0.0
    %248 = vmatpush2.msra.mxu0 0.0
    %249 = vmatprep.subr.mxu0 0.0
    %250 = vmatpush2.msra.mxu0 0.0
    %251 = vmatprep.subr.mxu0 0.0
    %252 = vmatpush2.msra.mxu0 0.0
    %253 = vmatprep.subr.mxu0 0.0
    %254 = vmatpush2.msra.mxu0 0.0
    %255 = vmatprep.subr.mxu0 0.0
    %256 = vmatpush2.msra.mxu0 0.0
    %257 = vmatprep.subr.mxu0 0.0
    %258 = vmatpush2.msra.mxu0 0.0
    %259 = vmatprep.subr.mxu0 0.0
    %260 = vmatpush2.msra.mxu0 0.0
    %261 = vmatprep.subr.mxu0 0.0
    %262 = vmatpush2.msra.mxu0 0.0
    %263 = vmatprep.subr.mxu0 0.0
    %264 = vmatpush2.msra.mxu0 0.0
    %265 = vmatprep.subr.mxu0 0.0
    %266 = vmatpush2.msra.mxu0 0.0
    %267 = vmatprep.subr.mxu0 0.0
    %268 = vmatpush2.msra.mxu0 0.0
    %269 = vmatprep.mubr.f32.mxu0 0.0
    %270 = vmatmul.mubr.f32.gmra.mxu0 %v194
    %v271 = vpop.f32.mrf.mxu0
    %v272 = vadd.f32 %v176, %v271
    %v273 = vpop.f32.mrf.mxu0
    %274 = vmatprep.mubr.f32.mxu0 0.0
    %275 = vmatmul.mubr.f32.gmra.mxu0 %v197
    %v276 = vpop.f32.mrf.mxu0
    %v277 = vadd.f32 %v181, %v276
    %v278 = vpop.f32.mrf.mxu0
    %279 = vmatprep.mubr.f32.mxu0 0.0
    %280 = vmatmul.mubr.f32.gmra.mxu0 %v200
    %v281 = vpop.f32.mrf.mxu0
    %v282 = vadd.f32 %v186, %v281
    %v283 = vpop.f32.mrf.mxu0
    %284 = vmatprep.mubr.f32.mxu0 0.0
    %285 = vmatmul.mubr.f32.gmra.mxu0 %v203
    %v286 = vpop.f32.mrf.mxu0
    %v287 = vadd.f32 %v191, %v286
    %v288 = vpop.f32.mrf.mxu0
    %289 = vdwg.mxu0
    %v290 = vmax.f32 %v272, 0.0
    %v291 = vmax.f32 %v277, 0.0
    %v292 = vmax.f32 %v282, 0.0
    %v293 = vmax.f32 %v287, 0.0
    %s294 = scalar_lea.vmem %s1, 64
    %v295 = vld [vmem:[%s294] sm:$0xff]
    %v296 = vld [vmem:[%s294 + $0x8] sm:$0xff]
    %v297 = vld [vmem:[%s294 + $0x10] sm:$0xff]
    %v298 = vld [vmem:[%s294 + $0x18] sm:$0xff]
    %s299 = scalar_lea.vmem %s2, 64
    %v300 = vld [vmem:[%s299] sm:$0xff]
    %v301 = vld [vmem:[%s299 + $0x8] sm:$0xff]
    %v302 = vld [vmem:[%s299 + $0x10] sm:$0xff]
    %v303 = vld [vmem:[%s299 + $0x18] sm:$0xff]
    %305 = vset.pattern.permute.xlu0 0
    %306 = vperm.xlu0 %305, %v300
    %v307 = vpop.permute.xlu0 %306
    %310 = vset.pattern.permute.xlu0 0
    %311 = vperm.xlu0 %310, %v301
    %v312 = vpop.permute.xlu0 %311
    %315 = vset.pattern.permute.xlu0 0
    %316 = vperm.xlu0 %315, %v302
    %v317 = vpop.permute.xlu0 %316
    %320 = vset.pattern.permute.xlu0 0
    %321 = vperm.xlu0 %320, %v303
    %v322 = vpop.permute.xlu0 %321
    %v325 = vsel %vm61, %v295, 0
    %v328 = vsel %vm61, %v296, 0
    %v331 = vsel %vm61, %v297, 0
    %v334 = vsel %vm61, %v298, 0
    %336 = vmatprep.subr.mxu0 0.0
    %337 = vmatpush1.msra.mxu0 0.0
    %338 = vmatprep.subr.mxu0 0.0
    %339 = vmatpush1.msra.mxu0 0.0
    %340 = vmatprep.subr.mxu0 0.0
    %341 = vmatpush1.msra.mxu0 0.0
    %342 = vmatprep.subr.mxu0 0.0
    %343 = vmatpush1.msra.mxu0 0.0
    %344 = vmatprep.subr.mxu0 0.0
    %345 = vmatpush1.msra.mxu0 0.0
    %346 = vmatprep.subr.mxu0 0.0
    %347 = vmatpush1.msra.mxu0 0.0
    %348 = vmatprep.subr.mxu0 0.0
    %349 = vmatpush1.msra.mxu0 0.0
    %350 = vmatprep.subr.mxu0 0.0
    %351 = vmatpush1.msra.mxu0 0.0
    %352 = vmatprep.subr.mxu0 0.0
    %353 = vmatpush1.msra.mxu0 0.0
    %354 = vmatprep.subr.mxu0 0.0
    %355 = vmatpush1.msra.mxu0 0.0
    %356 = vmatprep.subr.mxu0 0.0
    %357 = vmatpush1.msra.mxu0 0.0
    %358 = vmatprep.subr.mxu0 0.0
    %359 = vmatpush1.msra.mxu0 0.0
    %360 = vmatprep.subr.mxu0 0.0
    %361 = vmatpush1.msra.mxu0 %v293
    %362 = vmatprep.subr.mxu0 0.0
    %363 = vmatpush1.msra.mxu0 %v292
    %364 = vmatprep.subr.mxu0 0.0
    %365 = vmatpush1.msra.mxu0 %v291
    %366 = vmatprep.subr.mxu0 0.0
    %367 = vmatpush1.msra.mxu0 %v290
    %368 = vmatprep.subr.mxu0 0.0
    %369 = vmatpush2.msra.mxu0 0.0
    %370 = vmatprep.subr.mxu0 0.0
    %371 = vmatpush2.msra.mxu0 0.0
    %372 = vmatprep.subr.mxu0 0.0
    %373 = vmatpush2.msra.mxu0 0.0
    %374 = vmatprep.subr.mxu0 0.0
    %375 = vmatpush2.msra.mxu0 0.0
    %376 = vmatprep.subr.mxu0 0.0
    %377 = vmatpush2.msra.mxu0 0.0
    %378 = vmatprep.subr.mxu0 0.0
    %379 = vmatpush2.msra.mxu0 0.0
    %380 = vmatprep.subr.mxu0 0.0
    %381 = vmatpush2.msra.mxu0 0.0
    %382 = vmatprep.subr.mxu0 0.0
    %383 = vmatpush2.msra.mxu0 0.0
    %384 = vmatprep.subr.mxu0 0.0
    %385 = vmatpush2.msra.mxu0 0.0
    %386 = vmatprep.subr.mxu0 0.0
    %387 = vmatpush2.msra.mxu0 0.0
    %388 = vmatprep.subr.mxu0 0.0
    %389 = vmatpush2.msra.mxu0 0.0
    %390 = vmatprep.subr.mxu0 0.0
    %391 = vmatpush2.msra.mxu0 0.0
    %392 = vmatprep.subr.mxu0 0.0
    %393 = vmatpush2.msra.mxu0 0.0
    %394 = vmatprep.subr.mxu0 0.0
    %395 = vmatpush2.msra.mxu0 0.0
    %396 = vmatprep.subr.mxu0 0.0
    %397 = vmatpush2.msra.mxu0 0.0
    %398 = vmatprep.subr.mxu0 0.0
    %399 = vmatpush2.msra.mxu0 0.0
    %400 = vmatprep.mubr.f32.mxu0 0.0
    %401 = vmatmul.mubr.f32.gmra.mxu0 %v325
    %v402 = vpop.f32.mrf.mxu0
    %v403 = vadd.f32 %v307, %v402
    %v404 = vpop.f32.mrf.mxu0
    %405 = vmatprep.mubr.f32.mxu0 0.0
    %406 = vmatmul.mubr.f32.gmra.mxu0 %v328
    %v407 = vpop.f32.mrf.mxu0
    %v408 = vadd.f32 %v312, %v407
    %v409 = vpop.f32.mrf.mxu0
    %410 = vmatprep.mubr.f32.mxu0 0.0
    %411 = vmatmul.mubr.f32.gmra.mxu0 %v331
    %v412 = vpop.f32.mrf.mxu0
    %v413 = vadd.f32 %v317, %v412
    %v414 = vpop.f32.mrf.mxu0
    %415 = vmatprep.mubr.f32.mxu0 0.0
    %416 = vmatmul.mubr.f32.gmra.mxu0 %v334
    %v417 = vpop.f32.mrf.mxu0
    %v418 = vadd.f32 %v322, %v417
    %v419 = vpop.f32.mrf.mxu0
    %420 = vdwg.mxu0
    %v421 = vmax.f32 %v403, 0.0
    %v422 = vmax.f32 %v408, 0.0
    %v423 = vmax.f32 %v413, 0.0
    %v424 = vmax.f32 %v418, 0.0
    %s425 = scalar_lea.vmem %s1, 96
    %v426 = vld [vmem:[%s425] sm:$0xff]
    %v427 = vld [vmem:[%s425 + $0x8] sm:$0xff]
    %v428 = vld [vmem:[%s425 + $0x10] sm:$0xff]
    %v429 = vld [vmem:[%s425 + $0x18] sm:$0xff]
    %s430 = scalar_lea.vmem %s2, 96
    %v431 = vld [vmem:[%s430] sm:$0xff]
    %v432 = vld [vmem:[%s430 + $0x8] sm:$0xff]
    %v433 = vld [vmem:[%s430 + $0x10] sm:$0xff]
    %v434 = vld [vmem:[%s430 + $0x18] sm:$0xff]
    %436 = vset.pattern.permute.xlu0 0
    %437 = vperm.xlu0 %436, %v431
    %v438 = vpop.permute.xlu0 %437
    %441 = vset.pattern.permute.xlu0 0
    %442 = vperm.xlu0 %441, %v432
    %v443 = vpop.permute.xlu0 %442
    %446 = vset.pattern.permute.xlu0 0
    %447 = vperm.xlu0 %446, %v433
    %v448 = vpop.permute.xlu0 %447
    %451 = vset.pattern.permute.xlu0 0
    %452 = vperm.xlu0 %451, %v434
    %v453 = vpop.permute.xlu0 %452
    %v456 = vsel %vm61, %v426, 0
    %v459 = vsel %vm61, %v427, 0
    %v462 = vsel %vm61, %v428, 0
    %v465 = vsel %vm61, %v429, 0
    %467 = vmatprep.subr.mxu0 0.0
    %468 = vmatpush1.msra.mxu0 0.0
    %469 = vmatprep.subr.mxu0 0.0
    %470 = vmatpush1.msra.mxu0 0.0
    %471 = vmatprep.subr.mxu0 0.0
    %472 = vmatpush1.msra.mxu0 0.0
    %473 = vmatprep.subr.mxu0 0.0
    %474 = vmatpush1.msra.mxu0 0.0
    %475 = vmatprep.subr.mxu0 0.0
    %476 = vmatpush1.msra.mxu0 0.0
    %477 = vmatprep.subr.mxu0 0.0
    %478 = vmatpush1.msra.mxu0 0.0
    %479 = vmatprep.subr.mxu0 0.0
    %480 = vmatpush1.msra.mxu0 0.0
    %481 = vmatprep.subr.mxu0 0.0
    %482 = vmatpush1.msra.mxu0 0.0
    %483 = vmatprep.subr.mxu0 0.0
    %484 = vmatpush1.msra.mxu0 0.0
    %485 = vmatprep.subr.mxu0 0.0
    %486 = vmatpush1.msra.mxu0 0.0
    %487 = vmatprep.subr.mxu0 0.0
    %488 = vmatpush1.msra.mxu0 0.0
    %489 = vmatprep.subr.mxu0 0.0
    %490 = vmatpush1.msra.mxu0 0.0
    %491 = vmatprep.subr.mxu0 0.0
    %492 = vmatpush1.msra.mxu0 %v424
    %493 = vmatprep.subr.mxu0 0.0
    %494 = vmatpush1.msra.mxu0 %v423
    %495 = vmatprep.subr.mxu0 0.0
    %496 = vmatpush1.msra.mxu0 %v422
    %497 = vmatprep.subr.mxu0 0.0
    %498 = vmatpush1.msra.mxu0 %v421
    %499 = vmatprep.subr.mxu0 0.0
    %500 = vmatpush2.msra.mxu0 0.0
    %501 = vmatprep.subr.mxu0 0.0
    %502 = vmatpush2.msra.mxu0 0.0
    %503 = vmatprep.subr.mxu0 0.0
    %504 = vmatpush2.msra.mxu0 0.0
    %505 = vmatprep.subr.mxu0 0.0
    %506 = vmatpush2.msra.mxu0 0.0
    %507 = vmatprep.subr.mxu0 0.0
    %508 = vmatpush2.msra.mxu0 0.0
    %509 = vmatprep.subr.mxu0 0.0
    %510 = vmatpush2.msra.mxu0 0.0
    %511 = vmatprep.subr.mxu0 0.0
    %512 = vmatpush2.msra.mxu0 0.0
    %513 = vmatprep.subr.mxu0 0.0
    %514 = vmatpush2.msra.mxu0 0.0
    %515 = vmatprep.subr.mxu0 0.0
    %516 = vmatpush2.msra.mxu0 0.0
    %517 = vmatprep.subr.mxu0 0.0
    %518 = vmatpush2.msra.mxu0 0.0
    %519 = vmatprep.subr.mxu0 0.0
    %520 = vmatpush2.msra.mxu0 0.0
    %521 = vmatprep.subr.mxu0 0.0
    %522 = vmatpush2.msra.mxu0 0.0
    %523 = vmatprep.subr.mxu0 0.0
    %524 = vmatpush2.msra.mxu0 0.0
    %525 = vmatprep.subr.mxu0 0.0
    %526 = vmatpush2.msra.mxu0 0.0
    %527 = vmatprep.subr.mxu0 0.0
    %528 = vmatpush2.msra.mxu0 0.0
    %529 = vmatprep.subr.mxu0 0.0
    %530 = vmatpush2.msra.mxu0 0.0
    %531 = vmatprep.mubr.f32.mxu0 0.0
    %532 = vmatmul.mubr.f32.gmra.mxu0 %v456
    %v533 = vpop.f32.mrf.mxu0
    %v534 = vadd.f32 %v438, %v533
    %v535 = vpop.f32.mrf.mxu0
    %536 = vmatprep.mubr.f32.mxu0 0.0
    %537 = vmatmul.mubr.f32.gmra.mxu0 %v459
    %v538 = vpop.f32.mrf.mxu0
    %v539 = vadd.f32 %v443, %v538
    %v540 = vpop.f32.mrf.mxu0
    %541 = vmatprep.mubr.f32.mxu0 0.0
    %542 = vmatmul.mubr.f32.gmra.mxu0 %v462
    %v543 = vpop.f32.mrf.mxu0
    %v544 = vadd.f32 %v448, %v543
    %v545 = vpop.f32.mrf.mxu0
    %546 = vmatprep.mubr.f32.mxu0 0.0
    %547 = vmatmul.mubr.f32.gmra.mxu0 %v465
    %v548 = vpop.f32.mrf.mxu0
    %v549 = vadd.f32 %v453, %v548
    %v550 = vpop.f32.mrf.mxu0
    %551 = vdwg.mxu0
    %v552 = vmax.f32 %v534, 0.0
    %v553 = vmax.f32 %v539, 0.0
    %v554 = vmax.f32 %v544, 0.0
    %v555 = vmax.f32 %v549, 0.0
    %s556 = scalar_lea.vmem %s1, 128
    %v557 = vld [vmem:[%s556] sm:$0xff]
    %v558 = vld [vmem:[%s556 + $0x8] sm:$0xff]
    %v559 = vld [vmem:[%s556 + $0x10] sm:$0xff]
    %v560 = vld [vmem:[%s556 + $0x18] sm:$0xff]
    %s561 = scalar_lea.vmem %s2, 128
    %v562 = vld [vmem:[%s561] sm:$0xff]
    %v563 = vld [vmem:[%s561 + $0x8] sm:$0xff]
    %v564 = vld [vmem:[%s561 + $0x10] sm:$0xff]
    %v565 = vld [vmem:[%s561 + $0x18] sm:$0xff]
    %567 = vset.pattern.permute.xlu0 0
    %568 = vperm.xlu0 %567, %v562
    %v569 = vpop.permute.xlu0 %568
    %572 = vset.pattern.permute.xlu0 0
    %573 = vperm.xlu0 %572, %v563
    %v574 = vpop.permute.xlu0 %573
    %577 = vset.pattern.permute.xlu0 0
    %578 = vperm.xlu0 %577, %v564
    %v579 = vpop.permute.xlu0 %578
    %582 = vset.pattern.permute.xlu0 0
    %583 = vperm.xlu0 %582, %v565
    %v584 = vpop.permute.xlu0 %583
    %v587 = vsel %vm61, %v557, 0
    %v590 = vsel %vm61, %v558, 0
    %v593 = vsel %vm61, %v559, 0
    %v596 = vsel %vm61, %v560, 0
    %598 = vmatprep.subr.mxu0 0.0
    %599 = vmatpush1.msra.mxu0 0.0
    %600 = vmatprep.subr.mxu0 0.0
    %601 = vmatpush1.msra.mxu0 0.0
    %602 = vmatprep.subr.mxu0 0.0
    %603 = vmatpush1.msra.mxu0 0.0
    %604 = vmatprep.subr.mxu0 0.0
    %605 = vmatpush1.msra.mxu0 0.0
    %606 = vmatprep.subr.mxu0 0.0
    %607 = vmatpush1.msra.mxu0 0.0
    %608 = vmatprep.subr.mxu0 0.0
    %609 = vmatpush1.msra.mxu0 0.0
    %610 = vmatprep.subr.mxu0 0.0
    %611 = vmatpush1.msra.mxu0 0.0
    %612 = vmatprep.subr.mxu0 0.0
    %613 = vmatpush1.msra.mxu0 0.0
    %614 = vmatprep.subr.mxu0 0.0
    %615 = vmatpush1.msra.mxu0 0.0
    %616 = vmatprep.subr.mxu0 0.0
    %617 = vmatpush1.msra.mxu0 0.0
    %618 = vmatprep.subr.mxu0 0.0
    %619 = vmatpush1.msra.mxu0 0.0
    %620 = vmatprep.subr.mxu0 0.0
    %621 = vmatpush1.msra.mxu0 0.0
    %622 = vmatprep.subr.mxu0 0.0
    %623 = vmatpush1.msra.mxu0 %v555
    %624 = vmatprep.subr.mxu0 0.0
    %625 = vmatpush1.msra.mxu0 %v554
    %626 = vmatprep.subr.mxu0 0.0
    %627 = vmatpush1.msra.mxu0 %v553
    %628 = vmatprep.subr.mxu0 0.0
    %629 = vmatpush1.msra.mxu0 %v552
    %630 = vmatprep.subr.mxu0 0.0
    %631 = vmatpush2.msra.mxu0 0.0
    %632 = vmatprep.subr.mxu0 0.0
    %633 = vmatpush2.msra.mxu0 0.0
    %634 = vmatprep.subr.mxu0 0.0
    %635 = vmatpush2.msra.mxu0 0.0
    %636 = vmatprep.subr.mxu0 0.0
    %637 = vmatpush2.msra.mxu0 0.0
    %638 = vmatprep.subr.mxu0 0.0
    %639 = vmatpush2.msra.mxu0 0.0
    %640 = vmatprep.subr.mxu0 0.0
    %641 = vmatpush2.msra.mxu0 0.0
    %642 = vmatprep.subr.mxu0 0.0
    %643 = vmatpush2.msra.mxu0 0.0
    %644 = vmatprep.subr.mxu0 0.0
    %645 = vmatpush2.msra.mxu0 0.0
    %646 = vmatprep.subr.mxu0 0.0
    %647 = vmatpush2.msra.mxu0 0.0
    %648 = vmatprep.subr.mxu0 0.0
    %649 = vmatpush2.msra.mxu0 0.0
    %650 = vmatprep.subr.mxu0 0.0
    %651 = vmatpush2.msra.mxu0 0.0
    %652 = vmatprep.subr.mxu0 0.0
    %653 = vmatpush2.msra.mxu0 0.0
    %654 = vmatprep.subr.mxu0 0.0
    %655 = vmatpush2.msra.mxu0 0.0
    %656 = vmatprep.subr.mxu0 0.0
    %657 = vmatpush2.msra.mxu0 0.0
    %658 = vmatprep.subr.mxu0 0.0
    %659 = vmatpush2.msra.mxu0 0.0
    %660 = vmatprep.subr.mxu0 0.0
    %661 = vmatpush2.msra.mxu0 0.0
    %662 = vmatprep.mubr.f32.mxu0 0.0
    %663 = vmatmul.mubr.f32.gmra.mxu0 %v587
    %v664 = vpop.f32.mrf.mxu0
    %v665 = vadd.f32 %v569, %v664
    %v666 = vpop.f32.mrf.mxu0
    %667 = vmatprep.mubr.f32.mxu0 0.0
    %668 = vmatmul.mubr.f32.gmra.mxu0 %v590
    %v669 = vpop.f32.mrf.mxu0
    %v670 = vadd.f32 %v574, %v669
    %v671 = vpop.f32.mrf.mxu0
    %672 = vmatprep.mubr.f32.mxu0 0.0
    %673 = vmatmul.mubr.f32.gmra.mxu0 %v593
    %v674 = vpop.f32.mrf.mxu0
    %v675 = vadd.f32 %v579, %v674
    %v676 = vpop.f32.mrf.mxu0
    %677 = vmatprep.mubr.f32.mxu0 0.0
    %678 = vmatmul.mubr.f32.gmra.mxu0 %v596
    %v679 = vpop.f32.mrf.mxu0
    %v680 = vadd.f32 %v584, %v679
    %v681 = vpop.f32.mrf.mxu0
    %682 = vdwg.mxu0
    %v683 = vmax.f32 %v665, 0.0
    %v684 = vmax.f32 %v670, 0.0
    %v685 = vmax.f32 %v675, 0.0
    %v686 = vmax.f32 %v680, 0.0
    %s687 = scalar_lea.vmem %s1, 160
    %v688 = vld [vmem:[%s687] sm:$0xff]
    %v689 = vld [vmem:[%s687 + $0x8] sm:$0xff]
    %v690 = vld [vmem:[%s687 + $0x10] sm:$0xff]
    %v691 = vld [vmem:[%s687 + $0x18] sm:$0xff]
    %s692 = scalar_lea.vmem %s2, 160
    %v693 = vld [vmem:[%s692] sm:$0xff]
    %v694 = vld [vmem:[%s692 + $0x8] sm:$0xff]
    %v695 = vld [vmem:[%s692 + $0x10] sm:$0xff]
    %v696 = vld [vmem:[%s692 + $0x18] sm:$0xff]
    %698 = vset.pattern.permute.xlu0 0
    %699 = vperm.xlu0 %698, %v693
    %v700 = vpop.permute.xlu0 %699
    %703 = vset.pattern.permute.xlu0 0
    %704 = vperm.xlu0 %703, %v694
    %v705 = vpop.permute.xlu0 %704
    %708 = vset.pattern.permute.xlu0 0
    %709 = vperm.xlu0 %708, %v695
    %v710 = vpop.permute.xlu0 %709
    %713 = vset.pattern.permute.xlu0 0
    %714 = vperm.xlu0 %713, %v696
    %v715 = vpop.permute.xlu0 %714
    %v718 = vsel %vm61, %v688, 0
    %v721 = vsel %vm61, %v689, 0
    %v724 = vsel %vm61, %v690, 0
    %v727 = vsel %vm61, %v691, 0
    %729 = vmatprep.subr.mxu0 0.0
    %730 = vmatpush1.msra.mxu0 0.0
    %731 = vmatprep.subr.mxu0 0.0
    %732 = vmatpush1.msra.mxu0 0.0
    %733 = vmatprep.subr.mxu0 0.0
    %734 = vmatpush1.msra.mxu0 0.0
    %735 = vmatprep.subr.mxu0 0.0
    %736 = vmatpush1.msra.mxu0 0.0
    %737 = vmatprep.subr.mxu0 0.0
    %738 = vmatpush1.msra.mxu0 0.0
    %739 = vmatprep.subr.mxu0 0.0
    %740 = vmatpush1.msra.mxu0 0.0
    %741 = vmatprep.subr.mxu0 0.0
    %742 = vmatpush1.msra.mxu0 0.0
    %743 = vmatprep.subr.mxu0 0.0
    %744 = vmatpush1.msra.mxu0 0.0
    %745 = vmatprep.subr.mxu0 0.0
    %746 = vmatpush1.msra.mxu0 0.0
    %747 = vmatprep.subr.mxu0 0.0
    %748 = vmatpush1.msra.mxu0 0.0
    %749 = vmatprep.subr.mxu0 0.0
    %750 = vmatpush1.msra.mxu0 0.0
    %751 = vmatprep.subr.mxu0 0.0
    %752 = vmatpush1.msra.mxu0 0.0
    %753 = vmatprep.subr.mxu0 0.0
    %754 = vmatpush1.msra.mxu0 %v686
    %755 = vmatprep.subr.mxu0 0.0
    %756 = vmatpush1.msra.mxu0 %v685
    %757 = vmatprep.subr.mxu0 0.0
    %758 = vmatpush1.msra.mxu0 %v684
    %759 = vmatprep.subr.mxu0 0.0
    %760 = vmatpush1.msra.mxu0 %v683
    %761 = vmatprep.subr.mxu0 0.0
    %762 = vmatpush2.msra.mxu0 0.0
    %763 = vmatprep.subr.mxu0 0.0
    %764 = vmatpush2.msra.mxu0 0.0
    %765 = vmatprep.subr.mxu0 0.0
    %766 = vmatpush2.msra.mxu0 0.0
    %767 = vmatprep.subr.mxu0 0.0
    %768 = vmatpush2.msra.mxu0 0.0
    %769 = vmatprep.subr.mxu0 0.0
    %770 = vmatpush2.msra.mxu0 0.0
    %771 = vmatprep.subr.mxu0 0.0
    %772 = vmatpush2.msra.mxu0 0.0
    %773 = vmatprep.subr.mxu0 0.0
    %774 = vmatpush2.msra.mxu0 0.0
    %775 = vmatprep.subr.mxu0 0.0
    %776 = vmatpush2.msra.mxu0 0.0
    %777 = vmatprep.subr.mxu0 0.0
    %778 = vmatpush2.msra.mxu0 0.0
    %779 = vmatprep.subr.mxu0 0.0
    %780 = vmatpush2.msra.mxu0 0.0
    %781 = vmatprep.subr.mxu0 0.0
    %782 = vmatpush2.msra.mxu0 0.0
    %783 = vmatprep.subr.mxu0 0.0
    %784 = vmatpush2.msra.mxu0 0.0
    %785 = vmatprep.subr.mxu0 0.0
    %786 = vmatpush2.msra.mxu0 0.0
    %787 = vmatprep.subr.mxu0 0.0
    %788 = vmatpush2.msra.mxu0 0.0
    %789 = vmatprep.subr.mxu0 0.0
    %790 = vmatpush2.msra.mxu0 0.0
    %791 = vmatprep.subr.mxu0 0.0
    %792 = vmatpush2.msra.mxu0 0.0
    %793 = vmatprep.mubr.f32.mxu0 0.0
    %794 = vmatmul.mubr.f32.gmra.mxu0 %v718
    %v795 = vpop.f32.mrf.mxu0
    %v796 = vadd.f32 %v700, %v795
    %v797 = vpop.f32.mrf.mxu0
    %798 = vmatprep.mubr.f32.mxu0 0.0
    %799 = vmatmul.mubr.f32.gmra.mxu0 %v721
    %v800 = vpop.f32.mrf.mxu0
    %v801 = vadd.f32 %v705, %v800
    %v802 = vpop.f32.mrf.mxu0
    %803 = vmatprep.mubr.f32.mxu0 0.0
    %804 = vmatmul.mubr.f32.gmra.mxu0 %v724
    %v805 = vpop.f32.mrf.mxu0
    %v806 = vadd.f32 %v710, %v805
    %v807 = vpop.f32.mrf.mxu0
    %808 = vmatprep.mubr.f32.mxu0 0.0
    %809 = vmatmul.mubr.f32.gmra.mxu0 %v727
    %v810 = vpop.f32.mrf.mxu0
    %v811 = vadd.f32 %v715, %v810
    %v812 = vpop.f32.mrf.mxu0
    %813 = vdwg.mxu0
    %v814 = vmax.f32 %v796, 0.0
    %v815 = vmax.f32 %v801, 0.0
    %v816 = vmax.f32 %v806, 0.0
    %v817 = vmax.f32 %v811, 0.0
    %s818 = scalar_lea.vmem %s1, 192
    %v819 = vld [vmem:[%s818] sm:$0xff]
    %v820 = vld [vmem:[%s818 + $0x8] sm:$0xff]
    %v821 = vld [vmem:[%s818 + $0x10] sm:$0xff]
    %v822 = vld [vmem:[%s818 + $0x18] sm:$0xff]
    %s823 = scalar_lea.vmem %s2, 192
    %v824 = vld [vmem:[%s823] sm:$0xff]
    %v825 = vld [vmem:[%s823 + $0x8] sm:$0xff]
    %v826 = vld [vmem:[%s823 + $0x10] sm:$0xff]
    %v827 = vld [vmem:[%s823 + $0x18] sm:$0xff]
    %829 = vset.pattern.permute.xlu0 0
    %830 = vperm.xlu0 %829, %v824
    %v831 = vpop.permute.xlu0 %830
    %834 = vset.pattern.permute.xlu0 0
    %835 = vperm.xlu0 %834, %v825
    %v836 = vpop.permute.xlu0 %835
    %839 = vset.pattern.permute.xlu0 0
    %840 = vperm.xlu0 %839, %v826
    %v841 = vpop.permute.xlu0 %840
    %844 = vset.pattern.permute.xlu0 0
    %845 = vperm.xlu0 %844, %v827
    %v846 = vpop.permute.xlu0 %845
    %v849 = vsel %vm61, %v819, 0
    %v852 = vsel %vm61, %v820, 0
    %v855 = vsel %vm61, %v821, 0
    %v858 = vsel %vm61, %v822, 0
    %860 = vmatprep.subr.mxu0 0.0
    %861 = vmatpush1.msra.mxu0 0.0
    %862 = vmatprep.subr.mxu0 0.0
    %863 = vmatpush1.msra.mxu0 0.0
    %864 = vmatprep.subr.mxu0 0.0
    %865 = vmatpush1.msra.mxu0 0.0
    %866 = vmatprep.subr.mxu0 0.0
    %867 = vmatpush1.msra.mxu0 0.0
    %868 = vmatprep.subr.mxu0 0.0
    %869 = vmatpush1.msra.mxu0 0.0
    %870 = vmatprep.subr.mxu0 0.0
    %871 = vmatpush1.msra.mxu0 0.0
    %872 = vmatprep.subr.mxu0 0.0
    %873 = vmatpush1.msra.mxu0 0.0
    %874 = vmatprep.subr.mxu0 0.0
    %875 = vmatpush1.msra.mxu0 0.0
    %876 = vmatprep.subr.mxu0 0.0
    %877 = vmatpush1.msra.mxu0 0.0
    %878 = vmatprep.subr.mxu0 0.0
    %879 = vmatpush1.msra.mxu0 0.0
    %880 = vmatprep.subr.mxu0 0.0
    %881 = vmatpush1.msra.mxu0 0.0
    %882 = vmatprep.subr.mxu0 0.0
    %883 = vmatpush1.msra.mxu0 0.0
    %884 = vmatprep.subr.mxu0 0.0
    %885 = vmatpush1.msra.mxu0 %v817
    %886 = vmatprep.subr.mxu0 0.0
    %887 = vmatpush1.msra.mxu0 %v816
    %888 = vmatprep.subr.mxu0 0.0
    %889 = vmatpush1.msra.mxu0 %v815
    %890 = vmatprep.subr.mxu0 0.0
    %891 = vmatpush1.msra.mxu0 %v814
    %892 = vmatprep.subr.mxu0 0.0
    %893 = vmatpush2.msra.mxu0 0.0
    %894 = vmatprep.subr.mxu0 0.0
    %895 = vmatpush2.msra.mxu0 0.0
    %896 = vmatprep.subr.mxu0 0.0
    %897 = vmatpush2.msra.mxu0 0.0
    %898 = vmatprep.subr.mxu0 0.0
    %899 = vmatpush2.msra.mxu0 0.0
    %900 = vmatprep.subr.mxu0 0.0
    %901 = vmatpush2.msra.mxu0 0.0
    %902 = vmatprep.subr.mxu0 0.0
    %903 = vmatpush2.msra.mxu0 0.0
    %904 = vmatprep.subr.mxu0 0.0
    %905 = vmatpush2.msra.mxu0 0.0
    %906 = vmatprep.subr.mxu0 0.0
    %907 = vmatpush2.msra.mxu0 0.0
    %908 = vmatprep.subr.mxu0 0.0
    %909 = vmatpush2.msra.mxu0 0.0
    %910 = vmatprep.subr.mxu0 0.0
    %911 = vmatpush2.msra.mxu0 0.0
    %912 = vmatprep.subr.mxu0 0.0
    %913 = vmatpush2.msra.mxu0 0.0
    %914 = vmatprep.subr.mxu0 0.0
    %915 = vmatpush2.msra.mxu0 0.0
    %916 = vmatprep.subr.mxu0 0.0
    %917 = vmatpush2.msra.mxu0 0.0
    %918 = vmatprep.subr.mxu0 0.0
    %919 = vmatpush2.msra.mxu0 0.0
    %920 = vmatprep.subr.mxu0 0.0
    %921 = vmatpush2.msra.mxu0 0.0
    %922 = vmatprep.subr.mxu0 0.0
    %923 = vmatpush2.msra.mxu0 0.0
    %924 = vmatprep.mubr.f32.mxu0 0.0
    %925 = vmatmul.mubr.f32.gmra.mxu0 %v849
    %v926 = vpop.f32.mrf.mxu0
    %v927 = vadd.f32 %v831, %v926
    %v928 = vpop.f32.mrf.mxu0
    %929 = vmatprep.mubr.f32.mxu0 0.0
    %930 = vmatmul.mubr.f32.gmra.mxu0 %v852
    %v931 = vpop.f32.mrf.mxu0
    %v932 = vadd.f32 %v836, %v931
    %v933 = vpop.f32.mrf.mxu0
    %934 = vmatprep.mubr.f32.mxu0 0.0
    %935 = vmatmul.mubr.f32.gmra.mxu0 %v855
    %v936 = vpop.f32.mrf.mxu0
    %v937 = vadd.f32 %v841, %v936
    %v938 = vpop.f32.mrf.mxu0
    %939 = vmatprep.mubr.f32.mxu0 0.0
    %940 = vmatmul.mubr.f32.gmra.mxu0 %v858
    %v941 = vpop.f32.mrf.mxu0
    %v942 = vadd.f32 %v846, %v941
    %v943 = vpop.f32.mrf.mxu0
    %944 = vdwg.mxu0
    %v945 = vmax.f32 %v927, 0.0
    %v946 = vmax.f32 %v932, 0.0
    %v947 = vmax.f32 %v937, 0.0
    %v948 = vmax.f32 %v942, 0.0
    %s949 = scalar_lea.vmem %s1, 224
    %v950 = vld [vmem:[%s949] sm:$0xff]
    %v951 = vld [vmem:[%s949 + $0x8] sm:$0xff]
    %v952 = vld [vmem:[%s949 + $0x10] sm:$0xff]
    %v953 = vld [vmem:[%s949 + $0x18] sm:$0xff]
    %s954 = scalar_lea.vmem %s2, 224
    %v955 = vld [vmem:[%s954] sm:$0xff]
    %v956 = vld [vmem:[%s954 + $0x8] sm:$0xff]
    %v957 = vld [vmem:[%s954 + $0x10] sm:$0xff]
    %v958 = vld [vmem:[%s954 + $0x18] sm:$0xff]
    %960 = vset.pattern.permute.xlu0 0
    %961 = vperm.xlu0 %960, %v955
    %v962 = vpop.permute.xlu0 %961
    %965 = vset.pattern.permute.xlu0 0
    %966 = vperm.xlu0 %965, %v956
    %v967 = vpop.permute.xlu0 %966
    %970 = vset.pattern.permute.xlu0 0
    %971 = vperm.xlu0 %970, %v957
    %v972 = vpop.permute.xlu0 %971
    %975 = vset.pattern.permute.xlu0 0
    %976 = vperm.xlu0 %975, %v958
    %v977 = vpop.permute.xlu0 %976
    %v980 = vsel %vm61, %v950, 0
    %v983 = vsel %vm61, %v951, 0
    %v986 = vsel %vm61, %v952, 0
    %v989 = vsel %vm61, %v953, 0
    %991 = vmatprep.subr.mxu0 0.0
    %992 = vmatpush1.msra.mxu0 0.0
    %993 = vmatprep.subr.mxu0 0.0
    %994 = vmatpush1.msra.mxu0 0.0
    %995 = vmatprep.subr.mxu0 0.0
    %996 = vmatpush1.msra.mxu0 0.0
    %997 = vmatprep.subr.mxu0 0.0
    %998 = vmatpush1.msra.mxu0 0.0
    %999 = vmatprep.subr.mxu0 0.0
    %1000 = vmatpush1.msra.mxu0 0.0
    %1001 = vmatprep.subr.mxu0 0.0
    %1002 = vmatpush1.msra.mxu0 0.0
    %1003 = vmatprep.subr.mxu0 0.0
    %1004 = vmatpush1.msra.mxu0 0.0
    %1005 = vmatprep.subr.mxu0 0.0
    %1006 = vmatpush1.msra.mxu0 0.0
    %1007 = vmatprep.subr.mxu0 0.0
    %1008 = vmatpush1.msra.mxu0 0.0
    %1009 = vmatprep.subr.mxu0 0.0
    %1010 = vmatpush1.msra.mxu0 0.0
    %1011 = vmatprep.subr.mxu0 0.0
    %1012 = vmatpush1.msra.mxu0 0.0
    %1013 = vmatprep.subr.mxu0 0.0
    %1014 = vmatpush1.msra.mxu0 0.0
    %1015 = vmatprep.subr.mxu0 0.0
    %1016 = vmatpush1.msra.mxu0 %v948
    %1017 = vmatprep.subr.mxu0 0.0
    %1018 = vmatpush1.msra.mxu0 %v947
    %1019 = vmatprep.subr.mxu0 0.0
    %1020 = vmatpush1.msra.mxu0 %v946
    %1021 = vmatprep.subr.mxu0 0.0
    %1022 = vmatpush1.msra.mxu0 %v945
    %1023 = vmatprep.subr.mxu0 0.0
    %1024 = vmatpush2.msra.mxu0 0.0
    %1025 = vmatprep.subr.mxu0 0.0
    %1026 = vmatpush2.msra.mxu0 0.0
    %1027 = vmatprep.subr.mxu0 0.0
    %1028 = vmatpush2.msra.mxu0 0.0
    %1029 = vmatprep.subr.mxu0 0.0
    %1030 = vmatpush2.msra.mxu0 0.0
    %1031 = vmatprep.subr.mxu0 0.0
    %1032 = vmatpush2.msra.mxu0 0.0
    %1033 = vmatprep.subr.mxu0 0.0
    %1034 = vmatpush2.msra.mxu0 0.0
    %1035 = vmatprep.subr.mxu0 0.0
    %1036 = vmatpush2.msra.mxu0 0.0
    %1037 = vmatprep.subr.mxu0 0.0
    %1038 = vmatpush2.msra.mxu0 0.0
    %1039 = vmatprep.subr.mxu0 0.0
    %1040 = vmatpush2.msra.mxu0 0.0
    %1041 = vmatprep.subr.mxu0 0.0
    %1042 = vmatpush2.msra.mxu0 0.0
    %1043 = vmatprep.subr.mxu0 0.0
    %1044 = vmatpush2.msra.mxu0 0.0
    %1045 = vmatprep.subr.mxu0 0.0
    %1046 = vmatpush2.msra.mxu0 0.0
    %1047 = vmatprep.subr.mxu0 0.0
    %1048 = vmatpush2.msra.mxu0 0.0
    %1049 = vmatprep.subr.mxu0 0.0
    %1050 = vmatpush2.msra.mxu0 0.0
    %1051 = vmatprep.subr.mxu0 0.0
    %1052 = vmatpush2.msra.mxu0 0.0
    %1053 = vmatprep.subr.mxu0 0.0
    %1054 = vmatpush2.msra.mxu0 0.0
    %1055 = vmatprep.mubr.f32.mxu0 0.0
    %1056 = vmatmul.mubr.f32.gmra.mxu0 %v980
    %v1057 = vpop.f32.mrf.mxu0
    %v1058 = vadd.f32 %v962, %v1057
    %v1059 = vpop.f32.mrf.mxu0
    %1060 = vmatprep.mubr.f32.mxu0 0.0
    %1061 = vmatmul.mubr.f32.gmra.mxu0 %v983
    %v1062 = vpop.f32.mrf.mxu0
    %v1063 = vadd.f32 %v967, %v1062
    %v1064 = vpop.f32.mrf.mxu0
    %1065 = vmatprep.mubr.f32.mxu0 0.0
    %1066 = vmatmul.mubr.f32.gmra.mxu0 %v986
    %v1067 = vpop.f32.mrf.mxu0
    %v1068 = vadd.f32 %v972, %v1067
    %v1069 = vpop.f32.mrf.mxu0
    %1070 = vmatprep.mubr.f32.mxu0 0.0
    %1071 = vmatmul.mubr.f32.gmra.mxu0 %v989
    %v1072 = vpop.f32.mrf.mxu0
    %v1073 = vadd.f32 %v977, %v1072
    %v1074 = vpop.f32.mrf.mxu0
    %1075 = vdwg.mxu0
    %1076 = vst [vmem:[#allocation5] sm:$0xff] %v1058
    %1077 = vst [vmem:[#allocation5 + $0x8] sm:$0xff] %v1063
    %1078 = vst [vmem:[#allocation5 + $0x10] sm:$0xff] %v1068
    %1079 = vst [vmem:[#allocation5 + $0x18] sm:$0xff] %v1073
    // Predicated region
    $region18: #{tpu_custom_call.1} parent=1 // pred_check
      _
    $region19: #{tpu_custom_call.1} parent=1 // pred_check_branch
      %1081 = sbr.rel (0) target = $region21
    $region20: #{tpu_custom_call.1} parent=1 // pred_region
      %s1083 = ssub.s32 512, 512
      %1084 = vsyncadd [#allocation4], %s1083
      %s1085 = sshll.u32 [#allocation5], 4
      %s1086 = int_to_ptr.vmem [resolvable:$true] %s1085
      %1091 = dma.vmem_to_hbm [thread:$0]  %s1086, 512, %s3, [#allocation4], 128, 128, 8
    $region21: #{tpu_custom_call.1} parent=1 // pred_fallthru
      _
    // Predicated region
    $region22: #{tpu_custom_call.1} parent=1 // pred_check
      _
    $region23: #{tpu_custom_call.1} parent=1 // pred_check_branch
      %1093 = sbr.rel (0) target = $region25
    $region24: #{tpu_custom_call.1} parent=1 // pred_region
      %1094 = dma.done [#allocation4], 512
    $region25: #{tpu_custom_call.1} parent=1 // pred_fallthru
      _
    %1095 = vsyncpa [#allocation3], 1
    %1096 = vsyncpa [#allocation4], 1

</llo_original>
